<compile_context>
chip_gen: v5e
topology: v5e:2x2
jax: 0.10.0
libtpu: 0.0.40
codegen_flags: <defaults>
</compile_context>

<pallas_src>
import functools
import math

import jax
import jax.numpy as jnp
from jax.experimental import pallas as pl
from jax.experimental.pallas import tpu as pltpu


def _add_pe_kernel(x_ref, inv_freq_ref, even_ref, o_ref, *, tile_seq):
    """x_ref/o_ref: (tile_seq, W) with W = batch*d_model; aux refs: (1, W)."""
    # Absolute sequence position of every row of this block.
    pos = pl.program_id(0) * tile_seq + jax.lax.broadcasted_iota(
        jnp.int32, x_ref.shape, 0)
    angle = pos.astype(jnp.float32) * inv_freq_ref[...]        # (tile, W)
    even = even_ref[...]                                       # (1, W) -> bcast
    pe = even * jnp.sin(angle) + (1.0 - even) * jnp.cos(angle)
    o_ref[...] = (x_ref[...].astype(jnp.float32) + pe).astype(o_ref.dtype)


def make_positional_encoding(d_model: int, max_len: int, dtype=jnp.float32):
    """pe buffer exactly like the PyTorch __init__ (used only as reference)."""
    position = jnp.arange(max_len, dtype=jnp.float32)[:, None]
    div_term = jnp.exp(
        jnp.arange(0, d_model, 2, dtype=jnp.float32)
        * (-math.log(10000.0) / d_model))
    pe = jnp.zeros((max_len, 1, d_model), dtype=jnp.float32)
    pe = pe.at[:, 0, 0::2].set(jnp.sin(position * div_term))
    if d_model % 2 == 0:
        pe = pe.at[:, 0, 1::2].set(jnp.cos(position * div_term))
    else:
        pe = pe.at[:, 0, 1::2].set(jnp.cos(position * div_term[:-1]))
    return pe.astype(dtype)


def _choose_tile_seq(seq_len, row_bytes, target_block_bytes=2 * 1024 * 1024):
    """Largest multiple-of-8 row tile giving ~<=2 MiB blocks."""
    if seq_len <= 8:
        return seq_len
    tile = max(8, target_block_bytes // max(row_bytes, 1))
    tile = max(8, (tile // 8) * 8)
    return min(tile, seq_len)


def positional_encoding_forward(x: jax.Array, tile_seq: int | None = None) -> jax.Array:
    """x: [seq_len, batch, d_model] -> x + pe[:seq_len] (dropout p=0 identity)."""
    seq_len, batch, d_model = x.shape
    W = batch * d_model
    x2d = x.reshape(seq_len, W)  # lane-dense, contiguous (free reshape)

    # Per-lane constants, folded over batch (lane l -> embedding index d = l % d_model).
    d_idx = jnp.arange(d_model, dtype=jnp.int32)
    pair = (d_idx - (d_idx % 2)).astype(jnp.float32)  # 2*floor(d/2)
    inv_freq = jnp.exp(pair * (-math.log(10000.0) / d_model))
    even = (d_idx % 2 == 0).astype(jnp.float32)
    inv_freq_f = jnp.tile(inv_freq, (batch,)).reshape(1, W)
    even_f = jnp.tile(even, (batch,)).reshape(1, W)

    row_bytes = W * x.dtype.itemsize
    if tile_seq is None:
        tile_seq = _choose_tile_seq(seq_len, row_bytes)
    else:
        tile_seq = min(int(tile_seq), seq_len)
        if tile_seq < seq_len:
            tile_seq = max(8, (tile_seq // 8) * 8)  # keep sublane multiple
    grid = (pl.cdiv(seq_len, tile_seq),)

    out2d = pl.pallas_call(
        functools.partial(_add_pe_kernel, tile_seq=tile_seq),
        out_shape=jax.ShapeDtypeStruct((seq_len, W), x.dtype),
        grid=grid,
        in_specs=[
            pl.BlockSpec((tile_seq, W), lambda s: (s, 0)),
            pl.BlockSpec((1, W), lambda s: (0, 0)),   # constant block: DMA'd once
            pl.BlockSpec((1, W), lambda s: (0, 0)),
        ],
        out_specs=pl.BlockSpec((tile_seq, W), lambda s: (s, 0)),
        compiler_params=pltpu.CompilerParams(
            dimension_semantics=("parallel",)),
    )(x2d, inv_freq_f, even_f)

    return out2d.reshape(seq_len, batch, d_model)


if __name__ == "__main__":
    seq_len, batch, d_model, max_len = 64, 2, 32, 128

    key = jax.random.PRNGKey(0)
    x = jax.random.normal(key, (seq_len, batch, d_model), dtype=jnp.float32)

    pe = make_positional_encoding(d_model, max_len)
    ref = x + pe[:seq_len]

    # Multi-step grid (tile_seq=16 -> 4 steps) exercises pipelining and the
    # per-block absolute-position offsets.
    out = jax.block_until_ready(positional_encoding_forward(x, tile_seq=16))
    assert out.shape == (seq_len, batch, d_model)
    assert jnp.allclose(out, ref, atol=1e-5), "mismatch vs reference (tiled)"

    # Default auto-tiling path (2 MiB-capped blocks).
    out2 = jax.block_until_ready(positional_encoding_forward(x))
    assert jnp.allclose(out2, ref, atol=1e-5), "mismatch vs reference (auto)"

    # Odd d_model + non-divisible seq boundary block.
    seq2, batch2, d2 = 20, 3, 17
    x_odd = jax.random.normal(jax.random.PRNGKey(1), (seq2, batch2, d2), jnp.float32)
    ref_odd = x_odd + make_positional_encoding(d2, 32)[:seq2]
    out_odd = jax.block_until_ready(positional_encoding_forward(x_odd, tile_seq=16))
    assert jnp.allclose(out_odd, ref_odd, atol=1e-5), "mismatch vs reference (odd d_model)"

    print("KERNEL_OK")
</pallas_src>

<mosaic_0001>
module attributes {stable_mosaic.version = 11 : i64} {
  func.func @_add_pe_kernel(%arg0: i32, %arg1: memref<16x64xf32, #tpu.memory_space<vmem>>, %arg2: memref<1x64xf32, #tpu.memory_space<vmem>>, %arg3: memref<1x64xf32, #tpu.memory_space<vmem>>, %arg4: memref<16x64xf32, #tpu.memory_space<vmem>>) attributes {dimension_semantics = [#tpu.dimension_semantics<parallel>], iteration_bounds = array<i64: 4>, scalar_prefetch = 0 : i64, scratch_operands = 0 : i64, tpu.core_type = #tpu.core_type<tc>, window_params = [{transform_indices = @transform_0, window_bounds = array<i64: 16, 64>}, {pipeline_mode = #tpu.pipeline_mode<synchronous>, transform_indices = @transform_1, window_bounds = array<i64: 1, 64>}, {pipeline_mode = #tpu.pipeline_mode<synchronous>, transform_indices = @transform_2, window_bounds = array<i64: 1, 64>}, {transform_indices = @transform_3, window_bounds = array<i64: 16, 64>}]} {
    %c16_i32 = arith.constant 16 : i32
    %0 = arith.muli %arg0, %c16_i32 : i32
    %1 = tpu.iota {dimensions = array<i32: 0>} : vector<16x64xi32>
    %2 = vector.broadcast %0 : i32 to vector<16x64xi32>
    %3 = arith.addi %2, %1 : vector<16x64xi32>
    %4 = arith.sitofp %3 : vector<16x64xi32> to vector<16x64xf32>
    %c0 = arith.constant 0 : index
    %c0_0 = arith.constant 0 : index
    %5 = vector.load %arg2[%c0, %c0_0] : memref<1x64xf32, #tpu.memory_space<vmem>>, vector<1x64xf32>
    %6 = vector.broadcast %5 : vector<1x64xf32> to vector<16x64xf32>
    %7 = arith.mulf %4, %6 : vector<16x64xf32>
    %c0_1 = arith.constant 0 : index
    %c0_2 = arith.constant 0 : index
    %8 = vector.load %arg3[%c0_1, %c0_2] : memref<1x64xf32, #tpu.memory_space<vmem>>, vector<1x64xf32>
    %9 = math.sin %7 : vector<16x64xf32>
    %10 = vector.broadcast %8 : vector<1x64xf32> to vector<16x64xf32>
    %11 = arith.mulf %10, %9 : vector<16x64xf32>
    %cst = arith.constant 1.000000e+00 : f32
    %12 = vector.broadcast %cst : f32 to vector<1x64xf32>
    %13 = arith.subf %12, %8 : vector<1x64xf32>
    %14 = math.cos %7 : vector<16x64xf32>
    %15 = vector.broadcast %13 : vector<1x64xf32> to vector<16x64xf32>
    %16 = arith.mulf %15, %14 : vector<16x64xf32>
    %17 = arith.addf %11, %16 : vector<16x64xf32>
    %c0_3 = arith.constant 0 : index
    %c0_4 = arith.constant 0 : index
    %18 = vector.load %arg1[%c0_3, %c0_4] : memref<16x64xf32, #tpu.memory_space<vmem>>, vector<16x64xf32>
    %19 = arith.addf %18, %17 : vector<16x64xf32>
    %c0_5 = arith.constant 0 : index
    %c0_6 = arith.constant 0 : index
    %20 = vector.load %arg4[%c0_5, %c0_6] : memref<16x64xf32, #tpu.memory_space<vmem>>, vector<16x64xf32>
    tpu.vector_store %arg4[%c0_5, %c0_6], %19 {strides = array<i32>} : memref<16x64xf32, #tpu.memory_space<vmem>>, vector<16x64xf32>,
    return
  }
  func.func @transform_0(%arg0: i32) -> (i32, i32) {
    %c0_i32 = arith.constant 0 : i32
    %c0_i32_0 = arith.constant 0 : i32
    return %arg0, %c0_i32 : i32, i32
  }
  func.func @transform_1(%arg0: i32) -> (i32, i32) {
    %c0_i32 = arith.constant 0 : i32
    %c0_i32_0 = arith.constant 0 : i32
    %c0_i32_1 = arith.constant 0 : i32
    return %c0_i32, %c0_i32_0 : i32, i32
  }
  func.func @transform_2(%arg0: i32) -> (i32, i32) {
    %c0_i32 = arith.constant 0 : i32
    %c0_i32_0 = arith.constant 0 : i32
    %c0_i32_1 = arith.constant 0 : i32
    return %c0_i32, %c0_i32_0 : i32, i32
  }
  func.func @transform_3(%arg0: i32) -> (i32, i32) {
    %c0_i32 = arith.constant 0 : i32
    %c0_i32_0 = arith.constant 0 : i32
    return %arg0, %c0_i32 : i32, i32
  }
}

</mosaic_0001>

<llo_original>
// kernel: tpu_custom_call.1
$region0: #{tpu_custom_call.1}
  #allocation0 [shape = 'u32[]', space=smem, size = 0x4, offset = 0x4, fixed_abs, tag = 'smem constant byte address 0x4 - core index']
  #allocation1 [shape = 'u32[72,128]{1,0:T(1,128)}', space=vmem, size = 0x9000, scoped, tag = 'internal scratch']
  %s0 = inlined_call_operand.hbm [shape: f32[64,64], index: 0, kind: input, shape index: {}]
  %s1 = inlined_call_operand.hbm [shape: f32[1,64], index: 1, kind: input, shape index: {}]
  %s2 = inlined_call_operand.vmem [shape: f32[1,64], index: 2, kind: input, shape index: {}]
  %s3 = inlined_call_operand.hbm [shape: f32[64,64], index: 3, kind: output, shape index: {}]
  %s4 = sld [smem:[#allocation0]]
  $region53: #{tpu_custom_call.1} parent=0
    _
  %s6 = ssub.s32 1, %s4
  %s7 = scalar_select 0, %s6, %s4
  $region1: #{tpu_custom_call.1} parent=0
    #allocation2 [shape = 'u8[16384]{0}', space=vmem, size = 0x4000, scoped, tag = 'input window, operand 0']
    #allocation3 [shape = 's32[2]{0}', space=sflag, size = 0x8, scoped, tag = 'scoped memory for tpu_custom_call.1']
    #allocation4 [shape = 's32[2]{0}', space=sflag, size = 0x8, scoped, tag = 'scoped memory for tpu_custom_call.1']
    #allocation5 [shape = 'u8[512]{0}', space=vmem, size = 0x400, scoped, tag = 'input window, operand 1, single buffered']
    #allocation6 [shape = 's32[1]{0}', space=sflag, size = 0x4, scoped, tag = 'scoped memory for tpu_custom_call.1']
    #allocation7 [shape = 'u8[16384]{0}', space=vmem, size = 0x4000, scoped, tag = 'output window, operand 0']
    %8 = vsyncpa [#allocation3], 0
    %s9 = scalar_lea.sflag [#allocation3], 1
    %10 = vsyncpa %s9, 0
    %11 = vsyncpa [#allocation6], 0
    %12 = vsyncpa [#allocation4], 0
    %s13 = scalar_lea.sflag [#allocation4], 1
    %14 = vsyncpa %s13, 0
    loop: start=0, step=1, limit=6
    $region2: #{tpu_custom_call.1} parent=1 // loop_pre_header
      _
    $region3: #{tpu_custom_call.1} parent=1 // loop_header
      %s16 = sphi 0, %s20
      %p17 = scmp.ge.s32.totalorder %s16, 6
      %s26 = sphi 0, %s28
      %s29 = sphi 0, %s26
      %s30 = sphi 0, %s29
      %s46 = sphi 0, %s30
      %s50 = sphi 0, %s50
      %s52 = sphi 0, %s50
      %s53 = sphi 0, %s52
      %s67 = sphi 0, %s53
      %s71 = sphi 0, %s71
      %s73 = sphi 0, %s71
      %s74 = sphi 0, %s73
      %s88 = sphi 0, %s74
      %s94 = sphi 0, %s96
      %s97 = sphi 0, %s94
      %s98 = sphi 0, %s97
      %s114 = sphi 0, %s98
    $region4: #{tpu_custom_call.1} parent=1 // loop_header_branch
      %19 = sbr.rel (%p17) target = $region8
    $region5: #{tpu_custom_call.1} parent=1 // loop_body
      %s21 = ssub.s32 %s16, 1
      %s22 = ssub.s32 %s16, 2
      %s23 = sadd.s32 %s16, 1
      %s24 = ssub.s32 %s16, %s23
      %p25 = scmp.eq.s32.totalorder %s24, 0
      %s27 = sadd.s32 %s26, 1
      %s28 = scalar_select %p25, %s26, %s27
      %p31 = pneg %p25
      %p32 = scmp.eq.s32.totalorder %s16, 3
      %p33 = por %p31, %p32
      %p34 = scmp.ne.s32.totalorder %s26, %s29
      %p35 = scmp.eq.s32.totalorder %s16, 0
      %p36 = por %p34, %p35
      %p37 = scmp.ne.s32.totalorder %s26, %s29
      %p38 = scmp.eq.s32.totalorder %s21, 3
      %p39 = por %p37, %p38
      %p40 = scmp.ne.s32.totalorder %s29, %s30
      %p41 = scmp.eq.s32.totalorder %s21, 0
      %p42 = por %p40, %p41
      %p43 = scmp.ne.s32.totalorder %s29, %s30
      %p44 = scmp.eq.s32.totalorder %s22, 3
      %p45 = por %p43, %p44
      %p47 = scmp.ne.s32.totalorder %s30, %s46
      %p48 = scmp.eq.s32.totalorder %s22, 0
      %p49 = por %p47, %p48
      %s51 = sadd.s32 %s50, 1
      %p54 = scmp.eq.s32.totalorder %s16, 3
      %p55 = scmp.ne.s32.totalorder %s50, %s52
      %p56 = scmp.eq.s32.totalorder %s16, 0
      %p57 = por %p55, %p56
      %p58 = scmp.ne.s32.totalorder %s50, %s52
      %p59 = scmp.eq.s32.totalorder %s21, 3
      %p60 = por %p58, %p59
      %p61 = scmp.ne.s32.totalorder %s52, %s53
      %p62 = scmp.eq.s32.totalorder %s21, 0
      %p63 = por %p61, %p62
      %p64 = scmp.ne.s32.totalorder %s52, %s53
      %p65 = scmp.eq.s32.totalorder %s22, 3
      %p66 = por %p64, %p65
      %p68 = scmp.ne.s32.totalorder %s53, %s67
      %p69 = scmp.eq.s32.totalorder %s22, 0
      %p70 = por %p68, %p69
      %s72 = sadd.s32 %s71, 1
      %p75 = scmp.eq.s32.totalorder %s16, 3
      %p76 = scmp.ne.s32.totalorder %s71, %s73
      %p77 = scmp.eq.s32.totalorder %s16, 0
      %p78 = por %p76, %p77
      %p79 = scmp.ne.s32.totalorder %s71, %s73
      %p80 = scmp.eq.s32.totalorder %s21, 3
      %p81 = por %p79, %p80
      %p82 = scmp.ne.s32.totalorder %s73, %s74
      %p83 = scmp.eq.s32.totalorder %s21, 0
      %p84 = por %p82, %p83
      %p85 = scmp.ne.s32.totalorder %s73, %s74
      %p86 = scmp.eq.s32.totalorder %s22, 3
      %p87 = por %p85, %p86
      %p89 = scmp.ne.s32.totalorder %s74, %s88
      %p90 = scmp.eq.s32.totalorder %s22, 0
      %p91 = por %p89, %p90
      %s92 = ssub.s32 %s16, %s23
      %p93 = scmp.eq.s32.totalorder %s92, 0
      %s95 = sadd.s32 %s94, 1
      %s96 = scalar_select %p93, %s94, %s95
      %p99 = pneg %p93
      %p100 = scmp.eq.s32.totalorder %s16, 3
      %p101 = por %p99, %p100
      %p102 = scmp.ne.s32.totalorder %s94, %s97
      %p103 = scmp.eq.s32.totalorder %s16, 0
      %p104 = por %p102, %p103
      %p105 = scmp.ne.s32.totalorder %s94, %s97
      %p106 = scmp.eq.s32.totalorder %s21, 3
      %p107 = por %p105, %p106
      %p108 = scmp.ne.s32.totalorder %s97, %s98
      %p109 = scmp.eq.s32.totalorder %s21, 0
      %p110 = por %p108, %p109
      %p111 = scmp.ne.s32.totalorder %s97, %s98
      %p112 = scmp.eq.s32.totalorder %s22, 3
      %p113 = por %p111, %p112
      %p115 = scmp.ne.s32.totalorder %s98, %s114
      %p116 = scmp.eq.s32.totalorder %s22, 0
      %p117 = por %p115, %p116
      %p118 = scmp.le.s32.totalorder 1, %s16
      %p119 = scmp.lt.s32.totalorder %s16, 5
      %p120 = pnand %p118, %p119
      %p121 = pneg %p120
      // Predicated region
      $region9: #{tpu_custom_call.1} parent=5 // pred_check
        _
      $region10: #{tpu_custom_call.1} parent=5 // pred_check_branch
        %123 = sbr.rel (%p120) target = $region12
      $region11: #{tpu_custom_call.1} parent=5 // pred_region
        %s124 = ssub.s32 %s16, 1
        // Predicated region
        $region13: #{tpu_custom_call.1} parent=11 // pred_check
          %p125 = pneg %p63
        $region14: #{tpu_custom_call.1} parent=11 // pred_check_branch
          %127 = sbr.rel (%p125) target = $region16
        $region15: #{tpu_custom_call.1} parent=11 // pred_region
          %129 = vsyncadd [#allocation6], 0
          %s131 = sshll.u32 %s1, 4
          %s132 = int_to_ptr.hbm [resolvable:$true] %s131
          %s133 = sshll.u32 [#allocation5], 4
          %s134 = int_to_ptr.vmem [resolvable:$true] %s133
          %136 = dma.hbm_to_vmem [thread:$0]  %s132, 16, %s134, [#allocation6]
        $region16: #{tpu_custom_call.1} parent=11 // pred_fallthru
          _
        // Predicated region
        $region17: #{tpu_custom_call.1} parent=11 // pred_check
          %p137 = pneg %p84
        $region18: #{tpu_custom_call.1} parent=11 // pred_check_branch
          %139 = sbr.rel (%p137) target = $region20
        $region19: #{tpu_custom_call.1} parent=11 // pred_region
          _
        $region20: #{tpu_custom_call.1} parent=11 // pred_fallthru
          _
      $region12: #{tpu_custom_call.1} parent=5 // pred_fallthru
        _
      %p140 = scmp.lt.s32.totalorder %s16, 4
      // Predicated region
      $region21: #{tpu_custom_call.1} parent=5 // pred_check
        %p141 = pneg %p140
      $region22: #{tpu_custom_call.1} parent=5 // pred_check_branch
        %143 = sbr.rel (%p141) target = $region24
      $region23: #{tpu_custom_call.1} parent=5 // pred_region
        // Predicated region
        $region25: #{tpu_custom_call.1} parent=23 // pred_check
          %p144 = pneg %p36
        $region26: #{tpu_custom_call.1} parent=23 // pred_check_branch
          %146 = sbr.rel (%p144) target = $region28
        $region27: #{tpu_custom_call.1} parent=23 // pred_region
          %s147 = sand.u32 %s26, 1
          %s148 = scalar_lea.sflag [#allocation3], %s147
          %s149 = sand.u32 %s26, 1
          %s150 = smul.addr %s149, 16
          %s151 = scalar_lea.vmem [#allocation2], %s150
          %s152 = smul.u32 2, %s16
          %154 = vsyncadd %s148, 0
          %s155 = smul.addr %s152, 8
          %s156 = scalar_lea.hbm %s0, %s155
          %s157 = sshll.u32 %s156, 4
          %s158 = int_to_ptr.hbm [resolvable:$true] %s157
          %s159 = sshll.u32 %s151, 4
          %s160 = int_to_ptr.vmem [resolvable:$true] %s159
          %165 = dma.hbm_to_vmem [thread:$0]  %s158, 256, %s160, %s148, 128, 128, 8
        $region28: #{tpu_custom_call.1} parent=23 // pred_fallthru
          _
      $region24: #{tpu_custom_call.1} parent=5 // pred_fallthru
        _
      %p166 = scmp.le.s32.totalorder 1, %s16
      %p167 = scmp.lt.s32.totalorder %s16, 5
      %p168 = pnand %p166, %p167
      %p169 = pneg %p168
      // Predicated region
      $region29: #{tpu_custom_call.1} parent=5 // pred_check
        _
      $region30: #{tpu_custom_call.1} parent=5 // pred_check_branch
        %171 = sbr.rel (%p168) target = $region32
      $region31: #{tpu_custom_call.1} parent=5 // pred_region
        %s172 = ssub.s32 %s16, 1
        %s173 = sand.u32 %s29, 1
        %s174 = scalar_lea.sflag [#allocation3], %s173
        %s175 = sand.u32 %s29, 1
        %s176 = smul.addr %s175, 16
        %s177 = scalar_lea.vmem [#allocation2], %s176
        // Predicated region
        $region33: #{tpu_custom_call.1} parent=31 // pred_check
          %p178 = pneg %p42
        $region34: #{tpu_custom_call.1} parent=31 // pred_check_branch
          %180 = sbr.rel (%p178) target = $region36
        $region35: #{tpu_custom_call.1} parent=31 // pred_region
          %182 = dma.done %s174, 256
        $region36: #{tpu_custom_call.1} parent=31 // pred_fallthru
          _
        // Predicated region
        $region37: #{tpu_custom_call.1} parent=31 // pred_check
          %p183 = pneg %p63
        $region38: #{tpu_custom_call.1} parent=31 // pred_check_branch
          %185 = sbr.rel (%p183) target = $region40
        $region39: #{tpu_custom_call.1} parent=31 // pred_region
          %187 = dma.done [#allocation6], 16
        $region40: #{tpu_custom_call.1} parent=31 // pred_fallthru
          _
        %s188 = sand.u32 %s29, 1
        %s189 = scalar_lea.sflag [#allocation3], %s188
        %s190 = sand.u32 %s29, 1
        %s191 = smul.addr %s190, 16
        %s192 = scalar_lea.vmem [#allocation2], %s191
        %p193 = pneg %p42
        %p194 = pneg %p39
        %p195 = pneg %p63
        %p196 = pneg %p60
        %p197 = pneg %p84
        %p198 = pneg %p81
        %p199 = pneg %p110
        %p200 = pneg %p107
        %s201 = sand.u32 %s97, 1
        %s202 = scalar_lea.sflag [#allocation4], %s201
        %s203 = sand.u32 %s97, 1
        %s204 = smul.addr %s203, 16
        %s205 = scalar_lea.vmem [#allocation7], %s204
        %s206 = smul.u32 2, %s21
        %s207 = smul.u32 2, %s21
        %s208 = smul.u32 %s21, 16
        %v209 = vlaneseq
        %v210 = vshrl.u32 %v209, 7
        %v211 = vadd.s32 %v210, 8
        %v212 = vstv %s208
        %v213 = vadd.s32 %v212, %v210
        %v214 = vadd.s32 %v212, %v211
        %v215 = vcvt.s32.f32 %v213
        %v216 = vcvt.s32.f32 %v214
        %v217 = vld [vmem:[#allocation5] sm:$0x1]
        %v219 = vperm.slane %v217, 0
        %v221 = vmul.f32 %v215, %v219
        %v222 = vmul.f32 %v216, %v219
        %v223 = vld [vmem:[%s2] sm:$0x1]
        %v224 = vand.u32 2147483647, %v221
        %vm225 = vcmp.le.f32.partialorder %v224, 0.7853982
        %vm226 = vcmp.lt.s32.totalorder %v221, 0
        %v227 = vand.u32 %v221, 2139095040
        %v228 = vshrl.u32 %v227, 23
        %v229 = vsub.s32 %v228, 127
        %v230 = vand.u32 2147483647, %v221
        %v231 = vand.u32 %v230, 8388607
        %v232 = vor.u32 %v231, 8388608
        %v233 = vsub.s32 0, %v232
        %v234 = vadd.s32 %v229, 1
        %vm235 = vcmp.gt.s32.totalorder %v234, 0
        %v236 = vsel %vm235, %v234, 0
        %v237 = vshrl.u32 %v236, 5
        %v238 = vand.u32 %v236, 31
        %v239 = vsub.s32 32, %v238
        %v240 = vshrl.u32 683565275, %v239
        %v241 = vshll.u32 683565275, %v238
        %v242 = vshrl.u32 2475754826, %v239
        %v243 = vor.u32 %v241, %v242
        %v244 = vshll.u32 2475754826, %v238
        %v245 = vshrl.u32 2131351028, %v239
        %v246 = vor.u32 %v244, %v245
        %v247 = vshll.u32 2131351028, %v238
        %v248 = vshrl.u32 2102212464, %v239
        %v249 = vor.u32 %v247, %v248
        %v250 = vshll.u32 2102212464, %v238
        %v251 = vshrl.u32 920167782, %v239
        %v252 = vor.u32 %v250, %v251
        %v253 = vshll.u32 920167782, %v238
        %v254 = vshrl.u32 1326507024, %v239
        %v255 = vor.u32 %v253, %v254
        %vm256 = vcmp.lt.s32.totalorder %v237, 1
        %vm257 = vcmp.lt.s32.totalorder %v237, 2
        %vm258 = vcmp.lt.s32.totalorder %v237, 3
        %vm259 = vcmp.lt.s32.totalorder %v237, 4
        %v260 = vsel %vm256, %v240, %v243
        %v261 = vsel %vm259, %v249, 2102212464
        %v262 = vsel %vm258, %v246, %v261
        %v263 = vsel %vm257, %v260, %v262
        %v264 = vsel %vm256, %v243, %v246
        %v265 = vsel %vm259, %v252, 920167782
        %v266 = vsel %vm258, %v249, %v265
        %v267 = vsel %vm257, %v264, %v266
        %v268 = vsel %vm256, %v246, %v249
        %v269 = vsel %vm259, %v255, 1326507024
        %v270 = vsel %vm258, %v252, %v269
        %v271 = vsel %vm257, %v268, %v270
        %v272 = vshll.u32 %v232, 8
        %v273 = vand.u32 %v272, 65535
        %v274 = vshrl.u32 %v272, 16
        %v275 = vand.u32 %v271, 65535
        %v276 = vshrl.u32 %v271, 16
        %v277 = vmul.u32 %v273, %v275
        %v278 = vmul.u32 %v273, %v276
        %v279 = vmul.u32 %v274, %v275
        %v280 = vmul.u32 %v274, %v276
        %v281 = vshll.u32 %v278, 16
        %v282 = vshrl.u32 %v278, 16
        %v283 = vshll.u32 %v279, 16
        %v284 = vshrl.u32 %v279, 16
        %vm285 = vc.u32 %v277, %v281
        %v286 = vsel %vm285, 1, 0
        %v287 = vadd.s32 %v277, %v281
        %v288 = vadd.s32 %v280, %v286
        %vm289 = vc.u32 %v287, %v283
        %v290 = vsel %vm289, 1, 0
        %v291 = vadd.s32 %v287, %v283
        %v292 = vadd.s32 %v288, %v290
        %v293 = vadd.s32 %v292, %v282
        %v294 = vadd.s32 %v293, %v284
        %v295 = vand.u32 %v272, 65535
        %v296 = vshrl.u32 %v272, 16
        %v297 = vand.u32 %v267, 65535
        %v298 = vshrl.u32 %v267, 16
        %v299 = vmul.u32 %v295, %v297
        %v300 = vmul.u32 %v295, %v298
        %v301 = vmul.u32 %v296, %v297
        %v302 = vmul.u32 %v296, %v298
        %v303 = vshll.u32 %v300, 16
        %v304 = vshrl.u32 %v300, 16
        %v305 = vshll.u32 %v301, 16
        %v306 = vshrl.u32 %v301, 16
        %vm307 = vc.u32 %v299, %v303
        %v308 = vsel %vm307, 1, 0
        %v309 = vadd.s32 %v299, %v303
        %v310 = vadd.s32 %v302, %v308
        %vm311 = vc.u32 %v309, %v305
        %v312 = vsel %vm311, 1, 0
        %v313 = vadd.s32 %v309, %v305
        %v314 = vadd.s32 %v310, %v312
        %v315 = vadd.s32 %v314, %v304
        %v316 = vadd.s32 %v315, %v306
        %v317 = vmul.u32 %v272, %v263
        %v318 = vadd.s32 %v294, %v313
        %vm319 = vc.u32 %v294, %v313
        %v320 = vadd.s32 %v316, 1
        %v321 = vsel %vm319, %v320, %v316
        %v322 = vadd.s32 %v317, %v321
        %v323 = vadd.s32 %v322, 536870912
        %v324 = vshrl.u32 %v323, 30
        %v325 = vshll.u32 %v324, 30
        %v326 = vsub.s32 %v322, %v325
        %vm327 = vcmp.lt.s32.totalorder %v326, 0
        %v328 = vsub.s32 0, %v326
        %v329 = vsel %vm327, %v328, %v326
        %v330 = vclz %v329
        %v331 = vsub.s32 %v330, 2
        %vm332 = vcmp.gt.s32.totalorder 0, %v331
        %v333 = vsel %vm332, 0, %v331
        %v334 = vsub.s32 32, %v333
        %v335 = vshll.u32 %v326, %v333
        %v336 = vshrl.u32 %v318, %v334
        %v337 = vor.u32 %v335, %v336
        %v338 = vsub.s32 4294967266, %v333
        %v339 = vadd.s32 %v338, 127
        %v340 = vshll.u32 %v339, 23
        %v341 = vor.u32 4788187, %v340
        %v342 = vand.u32 2147483647, %v341
        %v344 = vcvt.s32.f32 %v337
        %v345 = vmul.f32 %v344, %v342
        %v346 = vxor.u32 %v345, 2147483648
        %v347 = vsel %vm226, %v346, %v345
        %v348 = vsub.s32 4, %v324
        %v349 = vsel %vm226, %v348, %v324
        %v350 = vsel %vm225, %v221, %v347
        %v351 = vsel %vm225, 0, %v349
        %v352 = vmul.f32 %v350, %v350
        %v353 = vmul.f32 %v352, -0.001358992
        %v354 = vadd.f32 %v353, 0.041655596
        %v355 = vmul.f32 %v352, %v354
        %v356 = vadd.f32 %v355, -0.4999988
        %v357 = vmul.f32 %v352, %v356
        %v358 = vadd.f32 1.0, %v357
        %v359 = vmul.f32 %v350, %v350
        %v360 = vmul.f32 %v359, -0.00019511016
        %v361 = vadd.f32 %v360, 0.008332121
        %v362 = vmul.f32 %v359, %v361
        %v363 = vadd.f32 %v362, -0.16666654
        %v364 = vmul.f32 %v359, %v363
        %v365 = vadd.f32 %v364, 1.0
        %v366 = vmul.f32 %v365, %v350
        %vm367 = vweird.f32 %v221
        %v368 = vadd.s32 %v351, 3
        %v369 = vand.u32 %v368, 3
        %vm370 = vcmp.lt.s32.totalorder %v369, 2
        %vm371 = vcmp.eq.s32.totalorder %v369, 0
        %v372 = vxor.u32 %v366, 2147483648
        %v373 = vsel %vm371, %v358, %v372
        %vm374 = vcmp.eq.s32.totalorder %v369, 2
        %v375 = vxor.u32 %v358, 2147483648
        %v376 = vsel %vm374, %v375, %v366
        %v377 = vsel %vm370, %v373, %v376
        %v378 = vsel %vm367, nan, %v377
        %v379 = vand.u32 2147483647, %v222
        %vm380 = vcmp.le.f32.partialorder %v379, 0.7853982
        %vm381 = vcmp.lt.s32.totalorder %v222, 0
        %v382 = vand.u32 %v222, 2139095040
        %v383 = vshrl.u32 %v382, 23
        %v384 = vsub.s32 %v383, 127
        %v385 = vand.u32 2147483647, %v222
        %v386 = vand.u32 %v385, 8388607
        %v387 = vor.u32 %v386, 8388608
        %v388 = vsub.s32 0, %v387
        %v389 = vadd.s32 %v384, 1
        %vm390 = vcmp.gt.s32.totalorder %v389, 0
        %v391 = vsel %vm390, %v389, 0
        %v392 = vshrl.u32 %v391, 5
        %v393 = vand.u32 %v391, 31
        %v394 = vsub.s32 32, %v393
        %v395 = vshrl.u32 683565275, %v394
        %v396 = vshll.u32 683565275, %v393
        %v397 = vshrl.u32 2475754826, %v394
        %v398 = vor.u32 %v396, %v397
        %v399 = vshll.u32 2475754826, %v393
        %v400 = vshrl.u32 2131351028, %v394
        %v401 = vor.u32 %v399, %v400
        %v402 = vshll.u32 2131351028, %v393
        %v403 = vshrl.u32 2102212464, %v394
        %v404 = vor.u32 %v402, %v403
        %v405 = vshll.u32 2102212464, %v393
        %v406 = vshrl.u32 920167782, %v394
        %v407 = vor.u32 %v405, %v406
        %v408 = vshll.u32 920167782, %v393
        %v409 = vshrl.u32 1326507024, %v394
        %v410 = vor.u32 %v408, %v409
        %vm411 = vcmp.lt.s32.totalorder %v392, 1
        %vm412 = vcmp.lt.s32.totalorder %v392, 2
        %vm413 = vcmp.lt.s32.totalorder %v392, 3
        %vm414 = vcmp.lt.s32.totalorder %v392, 4
        %v415 = vsel %vm411, %v395, %v398
        %v416 = vsel %vm414, %v404, 2102212464
        %v417 = vsel %vm413, %v401, %v416
        %v418 = vsel %vm412, %v415, %v417
        %v419 = vsel %vm411, %v398, %v401
        %v420 = vsel %vm414, %v407, 920167782
        %v421 = vsel %vm413, %v404, %v420
        %v422 = vsel %vm412, %v419, %v421
        %v423 = vsel %vm411, %v401, %v404
        %v424 = vsel %vm414, %v410, 1326507024
        %v425 = vsel %vm413, %v407, %v424
        %v426 = vsel %vm412, %v423, %v425
        %v427 = vshll.u32 %v387, 8
        %v428 = vand.u32 %v427, 65535
        %v429 = vshrl.u32 %v427, 16
        %v430 = vand.u32 %v426, 65535
        %v431 = vshrl.u32 %v426, 16
        %v432 = vmul.u32 %v428, %v430
        %v433 = vmul.u32 %v428, %v431
        %v434 = vmul.u32 %v429, %v430
        %v435 = vmul.u32 %v429, %v431
        %v436 = vshll.u32 %v433, 16
        %v437 = vshrl.u32 %v433, 16
        %v438 = vshll.u32 %v434, 16
        %v439 = vshrl.u32 %v434, 16
        %vm440 = vc.u32 %v432, %v436
        %v441 = vsel %vm440, 1, 0
        %v442 = vadd.s32 %v432, %v436
        %v443 = vadd.s32 %v435, %v441
        %vm444 = vc.u32 %v442, %v438
        %v445 = vsel %vm444, 1, 0
        %v446 = vadd.s32 %v442, %v438
        %v447 = vadd.s32 %v443, %v445
        %v448 = vadd.s32 %v447, %v437
        %v449 = vadd.s32 %v448, %v439
        %v450 = vand.u32 %v427, 65535
        %v451 = vshrl.u32 %v427, 16
        %v452 = vand.u32 %v422, 65535
        %v453 = vshrl.u32 %v422, 16
        %v454 = vmul.u32 %v450, %v452
        %v455 = vmul.u32 %v450, %v453
        %v456 = vmul.u32 %v451, %v452
        %v457 = vmul.u32 %v451, %v453
        %v458 = vshll.u32 %v455, 16
        %v459 = vshrl.u32 %v455, 16
        %v460 = vshll.u32 %v456, 16
        %v461 = vshrl.u32 %v456, 16
        %vm462 = vc.u32 %v454, %v458
        %v463 = vsel %vm462, 1, 0
        %v464 = vadd.s32 %v454, %v458
        %v465 = vadd.s32 %v457, %v463
        %vm466 = vc.u32 %v464, %v460
        %v467 = vsel %vm466, 1, 0
        %v468 = vadd.s32 %v464, %v460
        %v469 = vadd.s32 %v465, %v467
        %v470 = vadd.s32 %v469, %v459
        %v471 = vadd.s32 %v470, %v461
        %v472 = vmul.u32 %v427, %v418
        %v473 = vadd.s32 %v449, %v468
        %vm474 = vc.u32 %v449, %v468
        %v475 = vadd.s32 %v471, 1
        %v476 = vsel %vm474, %v475, %v471
        %v477 = vadd.s32 %v472, %v476
        %v478 = vadd.s32 %v477, 536870912
        %v479 = vshrl.u32 %v478, 30
        %v480 = vshll.u32 %v479, 30
        %v481 = vsub.s32 %v477, %v480
        %vm482 = vcmp.lt.s32.totalorder %v481, 0
        %v483 = vsub.s32 0, %v481
        %v484 = vsel %vm482, %v483, %v481
        %v485 = vclz %v484
        %v486 = vsub.s32 %v485, 2
        %vm487 = vcmp.gt.s32.totalorder 0, %v486
        %v488 = vsel %vm487, 0, %v486
        %v489 = vsub.s32 32, %v488
        %v490 = vshll.u32 %v481, %v488
        %v491 = vshrl.u32 %v473, %v489
        %v492 = vor.u32 %v490, %v491
        %v493 = vsub.s32 4294967266, %v488
        %v494 = vadd.s32 %v493, 127
        %v495 = vshll.u32 %v494, 23
        %v496 = vor.u32 4788187, %v495
        %v497 = vand.u32 2147483647, %v496
        %v499 = vcvt.s32.f32 %v492
        %v500 = vmul.f32 %v499, %v497
        %v501 = vxor.u32 %v500, 2147483648
        %v502 = vsel %vm381, %v501, %v500
        %v503 = vsub.s32 4, %v479
        %v504 = vsel %vm381, %v503, %v479
        %v505 = vsel %vm380, %v222, %v502
        %v506 = vsel %vm380, 0, %v504
        %v507 = vmul.f32 %v505, %v505
        %v508 = vmul.f32 %v507, -0.001358992
        %v509 = vadd.f32 %v508, 0.041655596
        %v510 = vmul.f32 %v507, %v509
        %v511 = vadd.f32 %v510, -0.4999988
        %v512 = vmul.f32 %v507, %v511
        %v513 = vadd.f32 1.0, %v512
        %v514 = vmul.f32 %v505, %v505
        %v515 = vmul.f32 %v514, -0.00019511016
        %v516 = vadd.f32 %v515, 0.008332121
        %v517 = vmul.f32 %v514, %v516
        %v518 = vadd.f32 %v517, -0.16666654
        %v519 = vmul.f32 %v514, %v518
        %v520 = vadd.f32 %v519, 1.0
        %v521 = vmul.f32 %v520, %v505
        %vm522 = vweird.f32 %v222
        %v523 = vadd.s32 %v506, 3
        %v524 = vand.u32 %v523, 3
        %vm525 = vcmp.lt.s32.totalorder %v524, 2
        %vm526 = vcmp.eq.s32.totalorder %v524, 0
        %v527 = vxor.u32 %v521, 2147483648
        %v528 = vsel %vm526, %v513, %v527
        %vm529 = vcmp.eq.s32.totalorder %v524, 2
        %v530 = vxor.u32 %v513, 2147483648
        %v531 = vsel %vm529, %v530, %v521
        %v532 = vsel %vm525, %v528, %v531
        %v533 = vsel %vm522, nan, %v532
        %v535 = vperm.slane %v223, 0
        %v537 = vmul.f32 %v535, %v378
        %v538 = vmul.f32 %v535, %v533
        %v539 = vsub.f32 1.0, %v223
        %v540 = vand.u32 2147483647, %v221
        %vm541 = vcmp.le.f32.partialorder %v540, 0.7853982
        %vm542 = vcmp.lt.s32.totalorder %v221, 0
        %v543 = vand.u32 %v221, 2139095040
        %v544 = vshrl.u32 %v543, 23
        %v545 = vsub.s32 %v544, 127
        %v546 = vand.u32 2147483647, %v221
        %v547 = vand.u32 %v546, 8388607
        %v548 = vor.u32 %v547, 8388608
        %v549 = vsub.s32 0, %v548
        %v550 = vadd.s32 %v545, 1
        %vm551 = vcmp.gt.s32.totalorder %v550, 0
        %v552 = vsel %vm551, %v550, 0
        %v553 = vshrl.u32 %v552, 5
        %v554 = vand.u32 %v552, 31
        %v555 = vsub.s32 32, %v554
        %v556 = vshrl.u32 683565275, %v555
        %v557 = vshll.u32 683565275, %v554
        %v558 = vshrl.u32 2475754826, %v555
        %v559 = vor.u32 %v557, %v558
        %v560 = vshll.u32 2475754826, %v554
        %v561 = vshrl.u32 2131351028, %v555
        %v562 = vor.u32 %v560, %v561
        %v563 = vshll.u32 2131351028, %v554
        %v564 = vshrl.u32 2102212464, %v555
        %v565 = vor.u32 %v563, %v564
        %v566 = vshll.u32 2102212464, %v554
        %v567 = vshrl.u32 920167782, %v555
        %v568 = vor.u32 %v566, %v567
        %v569 = vshll.u32 920167782, %v554
        %v570 = vshrl.u32 1326507024, %v555
        %v571 = vor.u32 %v569, %v570
        %vm572 = vcmp.lt.s32.totalorder %v553, 1
        %vm573 = vcmp.lt.s32.totalorder %v553, 2
        %vm574 = vcmp.lt.s32.totalorder %v553, 3
        %vm575 = vcmp.lt.s32.totalorder %v553, 4
        %v576 = vsel %vm572, %v556, %v559
        %v577 = vsel %vm575, %v565, 2102212464
        %v578 = vsel %vm574, %v562, %v577
        %v579 = vsel %vm573, %v576, %v578
        %v580 = vsel %vm572, %v559, %v562
        %v581 = vsel %vm575, %v568, 920167782
        %v582 = vsel %vm574, %v565, %v581
        %v583 = vsel %vm573, %v580, %v582
        %v584 = vsel %vm572, %v562, %v565
        %v585 = vsel %vm575, %v571, 1326507024
        %v586 = vsel %vm574, %v568, %v585
        %v587 = vsel %vm573, %v584, %v586
        %v588 = vshll.u32 %v548, 8
        %v589 = vand.u32 %v588, 65535
        %v590 = vshrl.u32 %v588, 16
        %v591 = vand.u32 %v587, 65535
        %v592 = vshrl.u32 %v587, 16
        %v593 = vmul.u32 %v589, %v591
        %v594 = vmul.u32 %v589, %v592
        %v595 = vmul.u32 %v590, %v591
        %v596 = vmul.u32 %v590, %v592
        %v597 = vshll.u32 %v594, 16
        %v598 = vshrl.u32 %v594, 16
        %v599 = vshll.u32 %v595, 16
        %v600 = vshrl.u32 %v595, 16
        %vm601 = vc.u32 %v593, %v597
        %v602 = vsel %vm601, 1, 0
        %v603 = vadd.s32 %v593, %v597
        %v604 = vadd.s32 %v596, %v602
        %vm605 = vc.u32 %v603, %v599
        %v606 = vsel %vm605, 1, 0
        %v607 = vadd.s32 %v603, %v599
        %v608 = vadd.s32 %v604, %v606
        %v609 = vadd.s32 %v608, %v598
        %v610 = vadd.s32 %v609, %v600
        %v611 = vand.u32 %v588, 65535
        %v612 = vshrl.u32 %v588, 16
        %v613 = vand.u32 %v583, 65535
        %v614 = vshrl.u32 %v583, 16
        %v615 = vmul.u32 %v611, %v613
        %v616 = vmul.u32 %v611, %v614
        %v617 = vmul.u32 %v612, %v613
        %v618 = vmul.u32 %v612, %v614
        %v619 = vshll.u32 %v616, 16
        %v620 = vshrl.u32 %v616, 16
        %v621 = vshll.u32 %v617, 16
        %v622 = vshrl.u32 %v617, 16
        %vm623 = vc.u32 %v615, %v619
        %v624 = vsel %vm623, 1, 0
        %v625 = vadd.s32 %v615, %v619
        %v626 = vadd.s32 %v618, %v624
        %vm627 = vc.u32 %v625, %v621
        %v628 = vsel %vm627, 1, 0
        %v629 = vadd.s32 %v625, %v621
        %v630 = vadd.s32 %v626, %v628
        %v631 = vadd.s32 %v630, %v620
        %v632 = vadd.s32 %v631, %v622
        %v633 = vmul.u32 %v588, %v579
        %v634 = vadd.s32 %v610, %v629
        %vm635 = vc.u32 %v610, %v629
        %v636 = vadd.s32 %v632, 1
        %v637 = vsel %vm635, %v636, %v632
        %v638 = vadd.s32 %v633, %v637
        %v639 = vadd.s32 %v638, 536870912
        %v640 = vshrl.u32 %v639, 30
        %v641 = vshll.u32 %v640, 30
        %v642 = vsub.s32 %v638, %v641
        %vm643 = vcmp.lt.s32.totalorder %v642, 0
        %v644 = vsub.s32 0, %v642
        %v645 = vsel %vm643, %v644, %v642
        %v646 = vclz %v645
        %v647 = vsub.s32 %v646, 2
        %vm648 = vcmp.gt.s32.totalorder 0, %v647
        %v649 = vsel %vm648, 0, %v647
        %v650 = vsub.s32 32, %v649
        %v651 = vshll.u32 %v642, %v649
        %v652 = vshrl.u32 %v634, %v650
        %v653 = vor.u32 %v651, %v652
        %v654 = vsub.s32 4294967266, %v649
        %v655 = vadd.s32 %v654, 127
        %v656 = vshll.u32 %v655, 23
        %v657 = vor.u32 4788187, %v656
        %v658 = vand.u32 2147483647, %v657
        %v660 = vcvt.s32.f32 %v653
        %v661 = vmul.f32 %v660, %v658
        %v662 = vxor.u32 %v661, 2147483648
        %v663 = vsel %vm542, %v662, %v661
        %v664 = vsub.s32 4, %v640
        %v665 = vsel %vm542, %v664, %v640
        %v666 = vsel %vm541, %v221, %v663
        %v667 = vsel %vm541, 0, %v665
        %v668 = vmul.f32 %v666, %v666
        %v669 = vmul.f32 %v668, -0.001358992
        %v670 = vadd.f32 %v669, 0.041655596
        %v671 = vmul.f32 %v668, %v670
        %v672 = vadd.f32 %v671, -0.4999988
        %v673 = vmul.f32 %v668, %v672
        %v674 = vadd.f32 1.0, %v673
        %v675 = vmul.f32 %v666, %v666
        %v676 = vmul.f32 %v675, -0.00019511016
        %v677 = vadd.f32 %v676, 0.008332121
        %v678 = vmul.f32 %v675, %v677
        %v679 = vadd.f32 %v678, -0.16666654
        %v680 = vmul.f32 %v675, %v679
        %v681 = vadd.f32 %v680, 1.0
        %v682 = vmul.f32 %v681, %v666
        %vm683 = vweird.f32 %v221
        %v684 = vand.u32 %v667, 3
        %vm685 = vcmp.lt.s32.totalorder %v684, 2
        %vm686 = vcmp.eq.s32.totalorder %v684, 0
        %v687 = vxor.u32 %v682, 2147483648
        %v688 = vsel %vm686, %v674, %v687
        %vm689 = vcmp.eq.s32.totalorder %v684, 2
        %v690 = vxor.u32 %v674, 2147483648
        %v691 = vsel %vm689, %v690, %v682
        %v692 = vsel %vm685, %v688, %v691
        %v693 = vsel %vm683, nan, %v692
        %v694 = vand.u32 2147483647, %v222
        %vm695 = vcmp.le.f32.partialorder %v694, 0.7853982
        %vm696 = vcmp.lt.s32.totalorder %v222, 0
        %v697 = vand.u32 %v222, 2139095040
        %v698 = vshrl.u32 %v697, 23
        %v699 = vsub.s32 %v698, 127
        %v700 = vand.u32 2147483647, %v222
        %v701 = vand.u32 %v700, 8388607
        %v702 = vor.u32 %v701, 8388608
        %v703 = vsub.s32 0, %v702
        %v704 = vadd.s32 %v699, 1
        %vm705 = vcmp.gt.s32.totalorder %v704, 0
        %v706 = vsel %vm705, %v704, 0
        %v707 = vshrl.u32 %v706, 5
        %v708 = vand.u32 %v706, 31
        %v709 = vsub.s32 32, %v708
        %v710 = vshrl.u32 683565275, %v709
        %v711 = vshll.u32 683565275, %v708
        %v712 = vshrl.u32 2475754826, %v709
        %v713 = vor.u32 %v711, %v712
        %v714 = vshll.u32 2475754826, %v708
        %v715 = vshrl.u32 2131351028, %v709
        %v716 = vor.u32 %v714, %v715
        %v717 = vshll.u32 2131351028, %v708
        %v718 = vshrl.u32 2102212464, %v709
        %v719 = vor.u32 %v717, %v718
        %v720 = vshll.u32 2102212464, %v708
        %v721 = vshrl.u32 920167782, %v709
        %v722 = vor.u32 %v720, %v721
        %v723 = vshll.u32 920167782, %v708
        %v724 = vshrl.u32 1326507024, %v709
        %v725 = vor.u32 %v723, %v724
        %vm726 = vcmp.lt.s32.totalorder %v707, 1
        %vm727 = vcmp.lt.s32.totalorder %v707, 2
        %vm728 = vcmp.lt.s32.totalorder %v707, 3
        %vm729 = vcmp.lt.s32.totalorder %v707, 4
        %v730 = vsel %vm726, %v710, %v713
        %v731 = vsel %vm729, %v719, 2102212464
        %v732 = vsel %vm728, %v716, %v731
        %v733 = vsel %vm727, %v730, %v732
        %v734 = vsel %vm726, %v713, %v716
        %v735 = vsel %vm729, %v722, 920167782
        %v736 = vsel %vm728, %v719, %v735
        %v737 = vsel %vm727, %v734, %v736
        %v738 = vsel %vm726, %v716, %v719
        %v739 = vsel %vm729, %v725, 1326507024
        %v740 = vsel %vm728, %v722, %v739
        %v741 = vsel %vm727, %v738, %v740
        %v742 = vshll.u32 %v702, 8
        %v743 = vand.u32 %v742, 65535
        %v744 = vshrl.u32 %v742, 16
        %v745 = vand.u32 %v741, 65535
        %v746 = vshrl.u32 %v741, 16
        %v747 = vmul.u32 %v743, %v745
        %v748 = vmul.u32 %v743, %v746
        %v749 = vmul.u32 %v744, %v745
        %v750 = vmul.u32 %v744, %v746
        %v751 = vshll.u32 %v748, 16
        %v752 = vshrl.u32 %v748, 16
        %v753 = vshll.u32 %v749, 16
        %v754 = vshrl.u32 %v749, 16
        %vm755 = vc.u32 %v747, %v751
        %v756 = vsel %vm755, 1, 0
        %v757 = vadd.s32 %v747, %v751
        %v758 = vadd.s32 %v750, %v756
        %vm759 = vc.u32 %v757, %v753
        %v760 = vsel %vm759, 1, 0
        %v761 = vadd.s32 %v757, %v753
        %v762 = vadd.s32 %v758, %v760
        %v763 = vadd.s32 %v762, %v752
        %v764 = vadd.s32 %v763, %v754
        %v765 = vand.u32 %v742, 65535
        %v766 = vshrl.u32 %v742, 16
        %v767 = vand.u32 %v737, 65535
        %v768 = vshrl.u32 %v737, 16
        %v769 = vmul.u32 %v765, %v767
        %v770 = vmul.u32 %v765, %v768
        %v771 = vmul.u32 %v766, %v767
        %v772 = vmul.u32 %v766, %v768
        %v773 = vshll.u32 %v770, 16
        %v774 = vshrl.u32 %v770, 16
        %v775 = vshll.u32 %v771, 16
        %v776 = vshrl.u32 %v771, 16
        %vm777 = vc.u32 %v769, %v773
        %v778 = vsel %vm777, 1, 0
        %v779 = vadd.s32 %v769, %v773
        %v780 = vadd.s32 %v772, %v778
        %vm781 = vc.u32 %v779, %v775
        %v782 = vsel %vm781, 1, 0
        %v783 = vadd.s32 %v779, %v775
        %v784 = vadd.s32 %v780, %v782
        %v785 = vadd.s32 %v784, %v774
        %v786 = vadd.s32 %v785, %v776
        %v787 = vmul.u32 %v742, %v733
        %v788 = vadd.s32 %v764, %v783
        %vm789 = vc.u32 %v764, %v783
        %v790 = vadd.s32 %v786, 1
        %v791 = vsel %vm789, %v790, %v786
        %v792 = vadd.s32 %v787, %v791
        %v793 = vadd.s32 %v792, 536870912
        %v794 = vshrl.u32 %v793, 30
        %v795 = vshll.u32 %v794, 30
        %v796 = vsub.s32 %v792, %v795
        %vm797 = vcmp.lt.s32.totalorder %v796, 0
        %v798 = vsub.s32 0, %v796
        %v799 = vsel %vm797, %v798, %v796
        %v800 = vclz %v799
        %v801 = vsub.s32 %v800, 2
        %vm802 = vcmp.gt.s32.totalorder 0, %v801
        %v803 = vsel %vm802, 0, %v801
        %v804 = vsub.s32 32, %v803
        %v805 = vshll.u32 %v796, %v803
        %v806 = vshrl.u32 %v788, %v804
        %v807 = vor.u32 %v805, %v806
        %v808 = vsub.s32 4294967266, %v803
        %v809 = vadd.s32 %v808, 127
        %v810 = vshll.u32 %v809, 23
        %v811 = vor.u32 4788187, %v810
        %v812 = vand.u32 2147483647, %v811
        %v814 = vcvt.s32.f32 %v807
        %v815 = vmul.f32 %v814, %v812
        %v816 = vxor.u32 %v815, 2147483648
        %v817 = vsel %vm696, %v816, %v815
        %v818 = vsub.s32 4, %v794
        %v819 = vsel %vm696, %v818, %v794
        %v820 = vsel %vm695, %v222, %v817
        %v821 = vsel %vm695, 0, %v819
        %v822 = vmul.f32 %v820, %v820
        %v823 = vmul.f32 %v822, -0.001358992
        %v824 = vadd.f32 %v823, 0.041655596
        %v825 = vmul.f32 %v822, %v824
        %v826 = vadd.f32 %v825, -0.4999988
        %v827 = vmul.f32 %v822, %v826
        %v828 = vadd.f32 1.0, %v827
        %v829 = vmul.f32 %v820, %v820
        %v830 = vmul.f32 %v829, -0.00019511016
        %v831 = vadd.f32 %v830, 0.008332121
        %v832 = vmul.f32 %v829, %v831
        %v833 = vadd.f32 %v832, -0.16666654
        %v834 = vmul.f32 %v829, %v833
        %v835 = vadd.f32 %v834, 1.0
        %v836 = vmul.f32 %v835, %v820
        %vm837 = vweird.f32 %v222
        %v838 = vand.u32 %v821, 3
        %vm839 = vcmp.lt.s32.totalorder %v838, 2
        %vm840 = vcmp.eq.s32.totalorder %v838, 0
        %v841 = vxor.u32 %v836, 2147483648
        %v842 = vsel %vm840, %v828, %v841
        %vm843 = vcmp.eq.s32.totalorder %v838, 2
        %v844 = vxor.u32 %v828, 2147483648
        %v845 = vsel %vm843, %v844, %v836
        %v846 = vsel %vm839, %v842, %v845
        %v847 = vsel %vm837, nan, %v846
        %v849 = vperm.slane %v539, 0
        %v851 = vmul.f32 %v849, %v693
        %v852 = vmul.f32 %v849, %v847
        %v853 = vadd.f32 %v537, %v851
        %v854 = vadd.f32 %v538, %v852
        %v855 = vld [vmem:[%s177] sm:$0xff]
        %v856 = vld [vmem:[%s177 + $0x8] sm:$0xff]
        %v857 = vadd.f32 %v855, %v853
        %v858 = vadd.f32 %v856, %v854
        %vm859 = vcmask 523264
        %860 = vst.msk [vmem:[%s205] sm:$0xff] %vm859, %v857
        %861 = vst.msk [vmem:[%s205 + $0x8] sm:$0xff] %vm859, %v858
        %s862 = sand.u32 %s97, 1
        %s863 = scalar_lea.sflag [#allocation4], %s862
        %s864 = sand.u32 %s97, 1
        %s865 = smul.addr %s864, 16
        %s866 = scalar_lea.vmem [#allocation7], %s865
        // Predicated region
        $region41: #{tpu_custom_call.1} parent=31 // pred_check
          %p867 = pneg %p107
        $region42: #{tpu_custom_call.1} parent=31 // pred_check_branch
          %869 = sbr.rel (%p867) target = $region44
        $region43: #{tpu_custom_call.1} parent=31 // pred_region
          %s870 = smul.u32 2, %s21
          %872 = vsyncadd %s863, 0
          %s873 = smul.addr %s870, 8
          %s874 = scalar_lea.hbm %s3, %s873
          %s875 = sshll.u32 %s866, 4
          %s876 = int_to_ptr.vmem [resolvable:$true] %s875
          %s877 = sshll.u32 %s874, 4
          %s878 = int_to_ptr.hbm [resolvable:$true] %s877
          %883 = dma.vmem_to_hbm [thread:$0]  %s876, 256, %s878, %s863, 128, 128, 8
        $region44: #{tpu_custom_call.1} parent=31 // pred_fallthru
          _
      $region32: #{tpu_custom_call.1} parent=5 // pred_fallthru
        _
      %p884 = scmp.le.s32.totalorder 2, %s16
      // Predicated region
      $region45: #{tpu_custom_call.1} parent=5 // pred_check
        %p885 = pneg %p884
      $region46: #{tpu_custom_call.1} parent=5 // pred_check_branch
        %887 = sbr.rel (%p885) target = $region48
      $region47: #{tpu_custom_call.1} parent=5 // pred_region
        %s888 = ssub.s32 %s16, 2
        // Predicated region
        $region49: #{tpu_custom_call.1} parent=47 // pred_check
          %p889 = pneg %p113
        $region50: #{tpu_custom_call.1} parent=47 // pred_check_branch
          %891 = sbr.rel (%p889) target = $region52
        $region51: #{tpu_custom_call.1} parent=47 // pred_region
          %s892 = sand.u32 %s98, 1
          %s893 = scalar_lea.sflag [#allocation4], %s892
          %s894 = sand.u32 %s98, 1
          %s895 = smul.addr %s894, 16
          %s896 = scalar_lea.vmem [#allocation7], %s895
          %898 = dma.done %s893, 256
        $region52: #{tpu_custom_call.1} parent=47 // pred_fallthru
          _
      $region48: #{tpu_custom_call.1} parent=5 // pred_fallthru
        _
    $region6: #{tpu_custom_call.1} parent=1 // loop_footer
      %s20 = sadd.s32 1, %s16
    $region7: #{tpu_custom_call.1} parent=1 // loop_footer_branch
      %15 = sbr.rel target = $region3
    $region8: #{tpu_custom_call.1} parent=1 // loop_exit
      _
    %899 = vsyncpa [#allocation3], 1
    %s900 = scalar_lea.sflag [#allocation3], 1
    %901 = vsyncpa %s900, 1
    %902 = vsyncpa [#allocation6], 1
    %903 = vsyncpa [#allocation4], 1
    %s904 = scalar_lea.sflag [#allocation4], 1
    %905 = vsyncpa %s904, 1

</llo_original>
